<compile_context>
chip_gen: v6e
topology: v6e:2x2x1
jax: 0.10.0
libtpu: 0.0.40
codegen_flags: <defaults>
</compile_context>

<pallas_src>
import functools

import jax
import jax.numpy as jnp
from jax.experimental import pallas as pl
from jax.experimental.pallas import tpu as pltpu

EPS = 1e-6          # F.pairwise_distance default eps (added to the difference)
_OUT_LANES = 128    # lane-dense output row; wrapper slices element [0, 0]


def _contrastive_loss_kernel(out1_ref, stacked_ref, loss_ref, *,
                             alpha, label, margin, v):
    """Fused single-invocation kernel.

    out1_ref    : VMEM (1, D)        f32  -- output1 (B = 1)
    stacked_ref : VMEM (N_VEC+1, D)  f32  -- rows 0..N-1 = vectors, row N = feat1
    loss_ref    : VMEM (1, 128)      f32  -- scalar loss broadcast across lanes
    alpha / label / margin / v are compile-time Python floats.
    """
    x = out1_ref[...]                                   # (1, D)
    s = stacked_ref[...]                                # (N+1, D)
    n_vec = s.shape[0] - 1
    inv_sqrt_d = jnp.float32(1.0 / (float(x.shape[-1]) ** 0.5))

    # One VPU pass + ONE cross-lane reduce + ONE EUP sqrt for all N+1 distances.
    diff = x - s + jnp.float32(EPS)                     # sublane-broadcast of x
    dist = jnp.sqrt(jnp.sum(diff * diff, axis=-1, keepdims=True))    # (N+1, 1)

    # Weights [1, ..., 1, alpha] built from iota + select (splat-safe constants).
    row = jax.lax.broadcasted_iota(jnp.int32, (n_vec + 1, 1), 0)
    w = jnp.where(row < n_vec, jnp.float32(1.0), jnp.float32(alpha))

    ed = jnp.sum(dist * w, axis=0, keepdims=True) * inv_sqrt_d       # (1, 1)
    if v > 0.0:                                         # compile-time constructor arg
        ed = ed * jnp.float32(1.0 / v)

    marg = (float(n_vec) + float(alpha)) * float(margin)             # python float
    # TODO(synk): the hinge below equals the reference torch.max(...) construct
    # only for B == 1 (the module itself is only well-defined for B == 1).
    hinge = jnp.maximum(jnp.float32(0.0), jnp.float32(marg) - ed)

    loss = (jnp.float32(1.0 - label) * ed * ed * jnp.float32(0.5)
            + jnp.float32(label) * hinge * hinge * jnp.float32(0.5))  # (1, 1)

    # Lane-dense store (no 1-wide masked vst / padded writeback).
    loss_ref[...] = jnp.broadcast_to(loss, loss_ref.shape)


@functools.partial(jax.jit, static_argnames=("alpha", "label", "margin", "v"))
def _contrastive_loss_stacked(output1, stacked, *, alpha, label, margin, v):
    """Hot path: output1 (1, D) f32, stacked (N_VEC+1, D) f32 (feat1 = last row)."""
    kernel = functools.partial(_contrastive_loss_kernel,
                               alpha=alpha, label=label, margin=margin, v=v)
    out = pl.pallas_call(
        kernel,
        out_shape=jax.ShapeDtypeStruct((1, _OUT_LANES), jnp.float32),
        in_specs=[
            pl.BlockSpec(memory_space=pltpu.MemorySpace.VMEM),   # output1 (1, D)
            pl.BlockSpec(memory_space=pltpu.MemorySpace.VMEM),   # stacked (N+1, D)
        ],
        out_specs=pl.BlockSpec(memory_space=pltpu.MemorySpace.VMEM),
    )(output1, stacked)
    return out[0, :1]                                   # (1,), matches PyTorch (B=1)


def stack_vectors(vectors, feat1):
    """One-time prep OUTSIDE the per-call hot path: stack the python list of
    (1, D) vectors with feat1 appended as the last (alpha-weighted) row."""
    rows = [jnp.asarray(vv, jnp.float32).reshape(1, -1) for vv in vectors]
    rows.append(jnp.asarray(feat1, jnp.float32).reshape(1, -1))
    return jnp.concatenate(rows, axis=0)                # (N_VEC + 1, D)


def contrastive_loss(output1, vectors, feat1, label, alpha, *, margin=0.8, v=0.0):
    """Drop-in equivalent of ContrastiveLoss.forward (B = 1).

    For repeated calls with the same `vectors`/`feat1`, precompute
    `stack_vectors(vectors, feat1)` once and call `_contrastive_loss_stacked`
    directly to avoid the per-call list stacking."""
    stacked = stack_vectors(vectors, feat1)
    output1 = jnp.asarray(output1, jnp.float32).reshape(1, -1)
    return _contrastive_loss_stacked(output1, stacked,
                                     alpha=float(alpha), label=float(label),
                                     margin=float(margin), v=float(v))


if __name__ == "__main__":
    key = jax.random.PRNGKey(0)
    B, D, N_VEC = 1, 32, 3                              # B = 1 implied by the module
    k1, k2, k3 = jax.random.split(key, 3)

    output1 = jax.random.normal(k1, (B, D), jnp.float32)
    vectors = [jax.random.normal(jax.random.fold_in(k2, i), (B, D), jnp.float32)
               for i in range(N_VEC)]
    feat1 = jax.random.normal(k3, (B, D), jnp.float32)
    alpha = 0.5
    margin = 0.8

    # Pure-JAX reference (same math, outside Pallas).
    def _pdist(a, b):
        return jnp.sqrt(jnp.sum((a - b + EPS) ** 2, axis=-1))

    def _ref(label, v):
        inv_sqrt_d = 1.0 / jnp.sqrt(jnp.float32(D))
        ed = sum(_pdist(output1, vv) for vv in vectors) * inv_sqrt_d
        ed = ed + alpha * _pdist(output1, feat1) * inv_sqrt_d
        marg = (N_VEC + alpha) * margin
        if v > 0.0:
            ed = ed / v
        return ((1.0 - label) * ed ** 2 * 0.5
                + label * jnp.maximum(0.0, marg - ed) ** 2 * 0.5)

    # Exercise both label branches and the v > 0 scaling branch.
    for (label, v) in [(1.0, 0.0), (0.0, 0.0), (1.0, 2.0)]:
        loss = contrastive_loss(output1, vectors, feat1, label, alpha,
                                margin=margin, v=v)
        loss = jax.block_until_ready(loss)
        ref = _ref(label, v)
        assert loss.shape == (B,)
        assert jnp.allclose(loss, ref, rtol=1e-5, atol=1e-5), (label, v, loss, ref)

    print("KERNEL_OK")
</pallas_src>

<mosaic_0001>
module attributes {stable_mosaic.version = 11 : i64} {
  func.func @_contrastive_loss_kernel(%arg0: memref<1x32xf32, #tpu.memory_space<vmem>>, %arg1: memref<4x32xf32, #tpu.memory_space<vmem>>, %arg2: memref<1x128xf32, #tpu.memory_space<vmem>>) attributes {dimension_semantics = [], scalar_prefetch = 0 : i64, scratch_operands = 0 : i64, tpu.core_type = #tpu.core_type<tc>} {
    %c0 = arith.constant 0 : index
    %c0_0 = arith.constant 0 : index
    %0 = vector.load %arg0[%c0, %c0_0] : memref<1x32xf32, #tpu.memory_space<vmem>>, vector<1x32xf32>
    %c0_1 = arith.constant 0 : index
    %c0_2 = arith.constant 0 : index
    %1 = vector.load %arg1[%c0_1, %c0_2] : memref<4x32xf32, #tpu.memory_space<vmem>>, vector<4x32xf32>
    %2 = vector.broadcast %0 : vector<1x32xf32> to vector<4x32xf32>
    %3 = arith.subf %2, %1 : vector<4x32xf32>
    %cst = arith.constant 9.99999997E-7 : f32
    %4 = vector.broadcast %cst : f32 to vector<4x32xf32>
    %5 = arith.addf %3, %4 : vector<4x32xf32>
    %6 = arith.mulf %5, %5 : vector<4x32xf32>
    %cst_3 = arith.constant dense<0.000000e+00> : vector<4xf32>
    %7 = vector.multi_reduction <add>, %6, %cst_3 [1] : vector<4x32xf32> to vector<4xf32>
    %8 = vector.shape_cast %7 : vector<4xf32> to vector<4x1xf32>
    %9 = math.sqrt %8 : vector<4x1xf32>
    %10 = tpu.iota {dimensions = array<i32: 0>} : vector<4x1xi32>
    %c3_i32 = arith.constant 3 : i32
    %11 = vector.broadcast %c3_i32 : i32 to vector<4x1xi32>
    %12 = arith.cmpi slt, %10, %11 : vector<4x1xi32>
    %cst_4 = arith.constant 1.000000e+00 : f32
    %cst_5 = arith.constant 5.000000e-01 : f32
    %13 = vector.broadcast %cst_4 : f32 to vector<4x1xf32>
    %14 = vector.broadcast %cst_5 : f32 to vector<4x1xf32>
    %15 = arith.select %12, %13, %14 : vector<4x1xi1>, vector<4x1xf32>
    %16 = arith.mulf %9, %15 : vector<4x1xf32>
    %cst_6 = arith.constant dense<0.000000e+00> : vector<1xf32>
    %17 = vector.multi_reduction <add>, %16, %cst_6 [0] : vector<4x1xf32> to vector<1xf32>
    %18 = vector.shape_cast %17 : vector<1xf32> to vector<1x1xf32>
    %cst_7 = arith.constant 0.176776692 : f32
    %19 = vector.broadcast %cst_7 : f32 to vector<1x1xf32>
    %20 = arith.mulf %18, %19 : vector<1x1xf32>
    %cst_8 = arith.constant 2.800000e+00 : f32
    %21 = vector.broadcast %cst_8 : f32 to vector<1x1xf32>
    %22 = arith.subf %21, %20 : vector<1x1xf32>
    %cst_9 = arith.constant 0.000000e+00 : f32
    %23 = vector.broadcast %cst_9 : f32 to vector<1x1xf32>
    %24 = arith.maximumf %23, %22 : vector<1x1xf32>
    %cst_10 = arith.constant 0.000000e+00 : f32
    %25 = vector.broadcast %cst_10 : f32 to vector<1x1xf32>
    %26 = arith.mulf %25, %20 : vector<1x1xf32>
    %27 = arith.mulf %26, %20 : vector<1x1xf32>
    %cst_11 = arith.constant 5.000000e-01 : f32
    %28 = vector.broadcast %cst_11 : f32 to vector<1x1xf32>
    %29 = arith.mulf %27, %28 : vector<1x1xf32>
    %cst_12 = arith.constant 1.000000e+00 : f32
    %30 = vector.broadcast %cst_12 : f32 to vector<1x1xf32>
    %31 = arith.mulf %30, %24 : vector<1x1xf32>
    %32 = arith.mulf %31, %24 : vector<1x1xf32>
    %cst_13 = arith.constant 5.000000e-01 : f32
    %33 = vector.broadcast %cst_13 : f32 to vector<1x1xf32>
    %34 = arith.mulf %32, %33 : vector<1x1xf32>
    %35 = arith.addf %29, %34 : vector<1x1xf32>
    %36 = vector.shape_cast %35 : vector<1x1xf32> to vector<1x1xf32>
    %37 = vector.broadcast %36 : vector<1x1xf32> to vector<1x128xf32>
    %c0_14 = arith.constant 0 : index
    %c0_15 = arith.constant 0 : index
    %38 = vector.load %arg2[%c0_14, %c0_15] : memref<1x128xf32, #tpu.memory_space<vmem>>, vector<1x128xf32>
    tpu.vector_store %arg2[%c0_14, %c0_15], %37 {strides = array<i32>} : memref<1x128xf32, #tpu.memory_space<vmem>>, vector<1x128xf32>,
    return
  }
}

</mosaic_0001>

<llo_original>
// kernel: _contrastive_loss_stacked.1
$region0: #{_contrastive_loss_stacked.1}
  #allocation0 [shape = 'u32[]', space=smem, size = 0x4, offset = 0x4, fixed_abs, tag = 'smem constant byte address 0x4 - core index']
  #allocation1 [shape = 'u32[144,128]{1,0:T(1,128)}', space=vmem, size = 0x12000, scoped, tag = 'internal scratch']
  %s0 = inlined_call_operand.hbm [shape: f32[1,32], index: 0, kind: input, shape index: {}]
  %s1 = inlined_call_operand.hbm [shape: f32[4,32], index: 1, kind: input, shape index: {}]
  %s2 = inlined_call_operand.hbm [shape: f32[1,128], index: 2, kind: output, shape index: {}]
  %s3 = sld [smem:[#allocation0]]
  $region26: #{_contrastive_loss_stacked.1} parent=0
    _
  %s5 = ssub.s32 1, %s3
  %s6 = scalar_select 0, %s5, %s3
  $region1: #{_contrastive_loss_stacked.1} parent=0
    #allocation2 [shape = 'u8[512]{0}', space=vmem, size = 0x400, scoped, tag = 'input window, operand 0, single buffered']
    #allocation3 [shape = 's32[1]{0}', space=sflag, size = 0x4, scoped, tag = 'scoped memory for _contrastive_loss_stacked.1']
    #allocation4 [shape = 's32[1]{0}', space=sflag, size = 0x4, scoped, tag = 'scoped memory for _contrastive_loss_stacked.1']
    #allocation5 [shape = 'u8[2048]{0}', space=vmem, size = 0x800, scoped, tag = 'input window, operand 1, single buffered']
    #allocation6 [shape = 's32[1]{0}', space=sflag, size = 0x4, scoped, tag = 'scoped memory for _contrastive_loss_stacked.1']
    #allocation7 [shape = 'u8[512]{0}', space=vmem, size = 0x400, scoped, tag = 'output window, operand 0, single buffered']
    %7 = vsyncpa [#allocation3], 0
    %8 = vsyncpa [#allocation6], 0
    %9 = vsyncpa [#allocation4], 0
    // Predicated region
    $region2: #{_contrastive_loss_stacked.1} parent=1 // pred_check
      _
    $region3: #{_contrastive_loss_stacked.1} parent=1 // pred_check_branch
      %11 = sbr.rel (0) target = $region5
    $region4: #{_contrastive_loss_stacked.1} parent=1 // pred_region
      %s13 = ssub.s32 16, 16
      %14 = vsyncadd [#allocation3], %s13
      %s16 = sshll.u32 [#allocation2], 4
      %s17 = int_to_ptr.vmem [resolvable:$true] %s16
      %19 = dma.hbm_to_vmem [thread:$0]  %s0, 16, %s17, [#allocation3]
    $region5: #{_contrastive_loss_stacked.1} parent=1 // pred_fallthru
      _
    // Predicated region
    $region6: #{_contrastive_loss_stacked.1} parent=1 // pred_check
      _
    $region7: #{_contrastive_loss_stacked.1} parent=1 // pred_check_branch
      %21 = sbr.rel (0) target = $region9
    $region8: #{_contrastive_loss_stacked.1} parent=1 // pred_region
      %s23 = ssub.s32 64, 64
      %24 = vsyncadd [#allocation6], %s23
      %s26 = sshll.u32 [#allocation5], 4
      %s27 = int_to_ptr.vmem [resolvable:$true] %s26
      %29 = dma.hbm_to_vmem [thread:$0]  %s1, 64, %s27, [#allocation6]
    $region9: #{_contrastive_loss_stacked.1} parent=1 // pred_fallthru
      _
    // Predicated region
    $region10: #{_contrastive_loss_stacked.1} parent=1 // pred_check
      _
    $region11: #{_contrastive_loss_stacked.1} parent=1 // pred_check_branch
      %31 = sbr.rel (0) target = $region13
    $region12: #{_contrastive_loss_stacked.1} parent=1 // pred_region
      %32 = dma.done [#allocation3], 16
    $region13: #{_contrastive_loss_stacked.1} parent=1 // pred_fallthru
      _
    // Predicated region
    $region14: #{_contrastive_loss_stacked.1} parent=1 // pred_check
      _
    $region15: #{_contrastive_loss_stacked.1} parent=1 // pred_check_branch
      %34 = sbr.rel (0) target = $region17
    $region16: #{_contrastive_loss_stacked.1} parent=1 // pred_region
      %35 = dma.done [#allocation6], 64
    $region17: #{_contrastive_loss_stacked.1} parent=1 // pred_fallthru
      _
    %v36 = vld [vmem:[#allocation2] sm:$0x1]
    %v37 = vld [vmem:[#allocation5] sm:$0xf]
    %v39 = vlaneseq
    %v40 = vshrl.u32 %v39, 7
    %v41 = vsub.s32 0, %v40
    %v42 = vrot.slane %v36, %v41
    %v44 = vsub.f32 %v42, %v37
    %v45 = vadd.f32 %v44, 1e-06
    %v46 = vmul.f32 %v45, %v45
    %vm47 = vcmask 257024
    %v48 = vsel %vm47, %v46, 0.0
    %49 = vadd.xlane.f32.xlu0 %v48
    %v50 = vpop.xlane.xlu0 %49
    %v51 = vrsqrt.pop %v50
    %v52 = vmul.f32 %v50, %v51
    %vm53 = vcmp.eq.f32.partialorder %v50, inf
    %v54 = vsel %vm53, %v50, %v52
    %vm55 = vcmp.eq.f32.partialorder %v50, 0.0
    %v56 = vand.u32 %v50, 2147483648
    %v57 = vsel %vm55, %v56, %v54
    %v58 = vlaneseq
    %v59 = vshrl.u32 %v58, 7
    %vm60 = vcmp.lt.s32.totalorder %v59, 3
    %v61 = vsel %vm60, 1.0, 0.5
    %v62 = vmul.f32 %v57, %v61
    %vm63 = vcmask 1043456
    %v64 = vsel %vm63, %v62, 0.0
    %v65 = vrot.slane %v64, 4
    %v66 = vadd.f32 %v64, %v65
    %v67 = vrot.slane %v66, 2
    %v68 = vadd.f32 %v66, %v67
    %v69 = vrot.slane %v68, 1
    %v70 = vadd.f32 %v68, %v69
    %v71 = vmul.f32 %v70, 0.17677669
    %v72 = vsub.f32 2.8, %v71
    %v73 = vmax.f32 %v72, 0.0
    %v74 = vmul.f32 %v71, 0.0
    %v75 = vmul.f32 %v74, %v71
    %v76 = vmul.f32 %v75, 0.5
    %v77 = vmul.f32 %v73, %v73
    %v78 = vmul.f32 %v77, 0.5
    %v79 = vadd.f32 %v76, %v78
    %80 = vst [vmem:[#allocation7] sm:$0x1] %v79
    // Predicated region
    $region18: #{_contrastive_loss_stacked.1} parent=1 // pred_check
      _
    $region19: #{_contrastive_loss_stacked.1} parent=1 // pred_check_branch
      %82 = sbr.rel (0) target = $region21
    $region20: #{_contrastive_loss_stacked.1} parent=1 // pred_region
      %s84 = ssub.s32 16, 16
      %85 = vsyncadd [#allocation4], %s84
      %s87 = sshll.u32 [#allocation7], 4
      %s88 = int_to_ptr.vmem [resolvable:$true] %s87
      %90 = dma.vmem_to_hbm [thread:$0]  %s88, 16, %s2, [#allocation4]
    $region21: #{_contrastive_loss_stacked.1} parent=1 // pred_fallthru
      _
    // Predicated region
    $region22: #{_contrastive_loss_stacked.1} parent=1 // pred_check
      _
    $region23: #{_contrastive_loss_stacked.1} parent=1 // pred_check_branch
      %92 = sbr.rel (0) target = $region25
    $region24: #{_contrastive_loss_stacked.1} parent=1 // pred_region
      %93 = dma.done [#allocation4], 16
    $region25: #{_contrastive_loss_stacked.1} parent=1 // pred_fallthru
      _
    %94 = vsyncpa [#allocation3], 1
    %95 = vsyncpa [#allocation6], 1
    %96 = vsyncpa [#allocation4], 1

</llo_original>
